<compile_context>
chip_gen: v5e
topology: v5e:2x2
jax: 0.10.0
libtpu: 0.0.40
codegen_flags: <defaults>
</compile_context>

<pallas_src>
import numpy as np
import jax
import jax.numpy as jnp
from jax import lax
from jax.experimental import pallas as pl
from jax.experimental.pallas import tpu as pltpu

# ---- hyper-parameters (the R dict of the original script), small synthetic values ----
IN_DIM = 4               # R['ChanNN_input_dim']
OUT_DIM = 4              # R['ChanNN_output_dim']
SEQ_LEN = 8              # R['Chan_seq_len']
D = IN_DIM * SEQ_LEN     # flattened conv1 receptive field = 32
H1, H2, H3 = 128, 64, 32
OUT_ROWS = 8             # conv2 output rows padded 4 -> 8 (sublane-aligned transposed store)
NEG_SLOPE = 0.01         # nn.LeakyReLU() default

NT_DIMS = (((1,), (1,)), ((), ()))   # q @ k^T - style contraction (rhs transposed)


def _leaky(x):
    return jnp.where(x > 0, x, NEG_SLOPE * x)


# --------------------------------------------------------------------------------------
# Kernel: 3 MXU matmuls over one batch tile; weights are VMEM-resident.
# --------------------------------------------------------------------------------------
def channelnn_var_kernel(x_ref,                 # (tb, D)        f32 (cast in-kernel)
                         wf_ref, bf_ref,        # (D, 64) mxu dt / (1, 64) f32   fused conv1+fc1
                         w2_ref, b2_ref,        # (64, 32)       / (1, 32) f32   fc2
                         w3_ref, b3_ref,        # (8, 32)        / (8, 1)  f32   conv2 (k=1), rows padded
                         out_ref):              # (8, tb)        f32             transposed, lane-dense
    mxu_dt = wf_ref.dtype

    # Cast the loaded tile in-kernel (free VPU work; avoids a separate XLA cast pass).
    x = x_ref[...].astype(mxu_dt)

    # fused conv1+fc1 (conv1 has no activation, so the composition is exact) + LeakyReLU
    h2 = _leaky(jnp.dot(x, wf_ref[...],
                        preferred_element_type=jnp.float32) + bf_ref[...])

    # fc2 + LeakyReLU
    h3 = _leaky(jnp.dot(h2.astype(mxu_dt), w2_ref[...],
                        preferred_element_type=jnp.float32) + b2_ref[...])

    # conv2 (kernel_size=1), computed output-transposed so the store is lane-dense:
    # (OUT_ROWS, 32) x (tb, 32)^T -> (OUT_ROWS, tb)
    out_ref[...] = lax.dot_general(w3_ref[...], h3.astype(mxu_dt), NT_DIMS,
                                   preferred_element_type=jnp.float32) + b3_ref[...]


# --------------------------------------------------------------------------------------
# Tiling: big batch tiles (>= 2 grid steps so v7x's 2 TensorCores both get work).
# --------------------------------------------------------------------------------------
def _choose_tiling(B, tb_max=8192):
    granule = 256                                   # keeps tb % 128 == 0 and tb % 8 == 0
    tb = min(tb_max, max(granule, granule * pl.cdiv(B, 2 * granule)))
    n_steps = max(2, pl.cdiv(B, tb))                # >= 2 steps for v7x megacore sharding
    return tb, tb * n_steps


# --------------------------------------------------------------------------------------
# One-time parameter prep (hoisted out of the forward, per perf review).
# --------------------------------------------------------------------------------------
def prepare_params(params, *, mxu_dtype=jnp.bfloat16):
    """Fuse conv1 into fc1 (exact in f32), cast weights to the MXU dtype, pad conv2 rows."""
    w1, b1, wfc1, bfc1, wfc2, bfc2, wc2, bc2 = params
    hi = lax.Precision.HIGHEST

    w1f = w1.reshape(H1, D).astype(jnp.float32)              # conv1 weight as (128, D) matmul
    wfc1f = wfc1.astype(jnp.float32)

    # fused conv1+fc1:  (x @ w1f^T + b1) @ wfc1^T + bfc1  ==  x @ wf^T + bf
    wf = jnp.matmul(wfc1f, w1f, precision=hi)                # (64, D)  f32
    bf = jnp.matmul(wfc1f, b1.astype(jnp.float32), precision=hi) + bfc1.astype(jnp.float32)

    # conv2 (kernel_size=1) as a matmul; pad output rows OUT_DIM -> OUT_ROWS for aligned stores.
    wc2m = wc2.reshape(OUT_DIM, H3).astype(jnp.float32)
    w3 = jnp.zeros((OUT_ROWS, H3), jnp.float32).at[:OUT_DIM].set(wc2m)
    b3 = jnp.zeros((OUT_ROWS,), jnp.float32).at[:OUT_DIM].set(bc2.astype(jnp.float32))

    return (
        wf.T.astype(mxu_dtype),                              # (D, 64)
        bf.reshape(1, H2).astype(jnp.float32),               # (1, 64)
        wfc2.astype(jnp.float32).T.astype(mxu_dtype),        # (64, 32)
        bfc2.reshape(1, H3).astype(jnp.float32),             # (1, 32)
        w3.astype(mxu_dtype),                                # (8, 32)  lhs of W3 @ h3^T
        b3.reshape(OUT_ROWS, 1).astype(jnp.float32),         # (8, 1)
    )


# --------------------------------------------------------------------------------------
# Forward wrapper.
# --------------------------------------------------------------------------------------
def channelnn_var_forward(x, prepared, *, tb_max=8192):
    """x: (B, IN_DIM, SEQ_LEN) -> (B, OUT_DIM) float32.  `prepared` = prepare_params(...)."""
    wfT, bf, w2T, b2, w3, b3 = prepared
    B = x.shape[0]

    # Row-major NCL flatten matches the row-major flatten of the conv1 weight.
    x_flat = x.reshape(B, D).astype(jnp.float32)

    tb, b_pad = _choose_tiling(B, tb_max)
    if b_pad != B:                                            # pad only when needed
        x_flat = jnp.pad(x_flat, ((0, b_pad - B), (0, 0)))

    resident = lambda i: (0, 0)   # constant block index -> weights stay VMEM-resident

    grid_spec = pltpu.PrefetchScalarGridSpec(
        num_scalar_prefetch=0,
        grid=(b_pad // tb,),                                  # batch tiles only
        in_specs=[
            pl.BlockSpec((tb, D), lambda i: (i, 0)),          # x tile: the only pipelined input DMA
            pl.BlockSpec((D, H2), resident),                  # fused conv1+fc1 weight
            pl.BlockSpec((1, H2), resident),
            pl.BlockSpec((H2, H3), resident),                 # fc2
            pl.BlockSpec((1, H3), resident),
            pl.BlockSpec((OUT_ROWS, H3), resident),           # conv2 (k=1), rows padded 4 -> 8
            pl.BlockSpec((OUT_ROWS, 1), resident),
        ],
        # Transposed, lane-dense output: (8, tb) block, tb % 128 == 0 -> unmasked vst.
        out_specs=pl.BlockSpec((OUT_ROWS, tb), lambda i: (0, i)),
    )

    out_t = pl.pallas_call(
        channelnn_var_kernel,
        out_shape=jax.ShapeDtypeStruct((OUT_ROWS, b_pad), jnp.float32),
        grid_spec=grid_spec,
        compiler_params=pltpu.CompilerParams(
            dimension_semantics=("parallel",),                # megacore-shardable batch axis
            vmem_limit_bytes=32 * 1024 * 1024),               # explicit headroom (v5e default is 16 MiB)
    )(x_flat, wfT, bf, w2T, b2, w3, b3)

    # Tiny (OUT_DIM, B) slice + transpose back to the module's (B, OUT_DIM) layout.
    return out_t[:OUT_DIM, :B].T


# --------------------------------------------------------------------------------------
# Synthetic parameters (PyTorch-native shapes) and pure-JAX reference.
# --------------------------------------------------------------------------------------
def init_params(key):
    keys = jax.random.split(key, 8)

    def rnd(k, shape, fan_in):
        return jax.random.normal(k, shape, jnp.float32) / np.sqrt(fan_in)

    w1   = rnd(keys[0], (H1, IN_DIM, SEQ_LEN), D)   # conv1.weight
    b1   = rnd(keys[1], (H1,), D)                   # conv1.bias
    wfc1 = rnd(keys[2], (H2, H1), H1)               # fc1.weight
    bfc1 = rnd(keys[3], (H2,), H1)                  # fc1.bias
    wfc2 = rnd(keys[4], (H3, H2), H2)               # fc2.weight
    bfc2 = rnd(keys[5], (H3,), H2)                  # fc2.bias
    wc2  = rnd(keys[6], (OUT_DIM, H3, 1), H3)       # conv2.weight
    bc2  = rnd(keys[7], (OUT_DIM,), H3)             # conv2.bias
    return (w1, b1, wfc1, bfc1, wfc2, bfc2, wc2, bc2)


def reference_forward(x, params):
    """Pure-JAX f32 mirror of the PyTorch forward (correctness check)."""
    w1, b1, wfc1, bfc1, wfc2, bfc2, wc2, bc2 = params
    hi = lax.Precision.HIGHEST
    B = x.shape[0]
    xf = x.reshape(B, D)
    h1 = jnp.matmul(xf, w1.reshape(H1, D).T, precision=hi) + b1          # conv1 (no activation)
    h2 = _leaky(jnp.matmul(h1, wfc1.T, precision=hi) + bfc1)             # act(fc1)
    h3 = _leaky(jnp.matmul(h2, wfc2.T, precision=hi) + bfc2)             # act(fc2)
    return jnp.matmul(h3, wc2.reshape(OUT_DIM, H3).T, precision=hi) + bc2  # conv2 (k=1)


if __name__ == "__main__":
    key = jax.random.PRNGKey(0)
    k_x, k_p = jax.random.split(key)

    B = 2
    x = jax.random.normal(k_x, (B, IN_DIM, SEQ_LEN), jnp.float32)
    params = init_params(k_p)

    ref = reference_forward(x, params)

    # Exact-semantics path (f32 all the way through the MXU).
    prep_f32 = prepare_params(params, mxu_dtype=jnp.float32)
    out_f32 = jax.block_until_ready(channelnn_var_forward(x, prep_f32))
    np.testing.assert_allclose(np.asarray(out_f32), np.asarray(ref), rtol=1e-4, atol=1e-4)

    # Performance path (bf16 MXU inputs, f32 accumulation / bias / activation).
    prep_bf16 = prepare_params(params, mxu_dtype=jnp.bfloat16)
    out_bf16 = jax.block_until_ready(channelnn_var_forward(x, prep_bf16))
    np.testing.assert_allclose(np.asarray(out_bf16), np.asarray(ref), rtol=5e-2, atol=5e-2)

    print("KERNEL_OK")
</pallas_src>

<mosaic_0001>
module attributes {stable_mosaic.version = 11 : i64} {
  func.func @channelnn_var_kernel(%arg0: i32, %arg1: memref<256x32xf32, #tpu.memory_space<vmem>>, %arg2: memref<32x64xf32, #tpu.memory_space<vmem>>, %arg3: memref<1x64xf32, #tpu.memory_space<vmem>>, %arg4: memref<64x32xf32, #tpu.memory_space<vmem>>, %arg5: memref<1x32xf32, #tpu.memory_space<vmem>>, %arg6: memref<8x32xf32, #tpu.memory_space<vmem>>, %arg7: memref<8x1xf32, #tpu.memory_space<vmem>>, %arg8: memref<8x256xf32, #tpu.memory_space<vmem>>) attributes {dimension_semantics = [#tpu.dimension_semantics<parallel>], iteration_bounds = array<i64: 2>, scalar_prefetch = 0 : i64, scratch_operands = 0 : i64, tpu.core_type = #tpu.core_type<tc>, window_params = [{transform_indices = @transform_0, window_bounds = array<i64: 256, 32>}, {pipeline_mode = #tpu.pipeline_mode<synchronous>, transform_indices = @transform_1, window_bounds = array<i64: 32, 64>}, {pipeline_mode = #tpu.pipeline_mode<synchronous>, transform_indices = @transform_2, window_bounds = array<i64: 1, 64>}, {pipeline_mode = #tpu.pipeline_mode<synchronous>, transform_indices = @transform_3, window_bounds = array<i64: 64, 32>}, {pipeline_mode = #tpu.pipeline_mode<synchronous>, transform_indices = @transform_4, window_bounds = array<i64: 1, 32>}, {pipeline_mode = #tpu.pipeline_mode<synchronous>, transform_indices = @transform_5, window_bounds = array<i64: 8, 32>}, {pipeline_mode = #tpu.pipeline_mode<synchronous>, transform_indices = @transform_6, window_bounds = array<i64: 8, 1>}, {transform_indices = @transform_7, window_bounds = array<i64: 8, 256>}]} {
    %c0 = arith.constant 0 : index
    %c0_0 = arith.constant 0 : index
    %0 = vector.load %arg1[%c0, %c0_0] : memref<256x32xf32, #tpu.memory_space<vmem>>, vector<256x32xf32>
    %c0_1 = arith.constant 0 : index
    %c0_2 = arith.constant 0 : index
    %1 = vector.load %arg2[%c0_1, %c0_2] : memref<32x64xf32, #tpu.memory_space<vmem>>, vector<32x64xf32>
    %cst = arith.constant dense<0.000000e+00> : vector<256x64xf32>
    %2 = tpu.matmul %0, %1, %cst {dimension_numbers = #tpu.dot_dimension_numbers<[1], [0], [0], [1], [0, 0, 1, 1], [], []>} : vector<256x32xf32>, vector<32x64xf32>, vector<256x64xf32> -> vector<256x64xf32>
    %c0_3 = arith.constant 0 : index
    %c0_4 = arith.constant 0 : index
    %3 = vector.load %arg3[%c0_3, %c0_4] : memref<1x64xf32, #tpu.memory_space<vmem>>, vector<1x64xf32>
    %4 = vector.broadcast %3 : vector<1x64xf32> to vector<256x64xf32>
    %5 = arith.addf %2, %4 : vector<256x64xf32>
    %cst_5 = arith.constant 0.000000e+00 : f32
    %6 = vector.broadcast %cst_5 : f32 to vector<256x64xf32>
    %7 = arith.cmpf ogt, %5, %6 : vector<256x64xf32>
    %cst_6 = arith.constant 0.00999999977 : f32
    %8 = vector.broadcast %cst_6 : f32 to vector<256x64xf32>
    %9 = arith.mulf %8, %5 : vector<256x64xf32>
    %10 = arith.select %7, %5, %9 : vector<256x64xi1>, vector<256x64xf32>
    %c0_7 = arith.constant 0 : index
    %c0_8 = arith.constant 0 : index
    %11 = vector.load %arg4[%c0_7, %c0_8] : memref<64x32xf32, #tpu.memory_space<vmem>>, vector<64x32xf32>
    %cst_9 = arith.constant dense<0.000000e+00> : vector<256x32xf32>
    %12 = tpu.matmul %10, %11, %cst_9 {dimension_numbers = #tpu.dot_dimension_numbers<[1], [0], [0], [1], [0, 0, 1, 1], [], []>} : vector<256x64xf32>, vector<64x32xf32>, vector<256x32xf32> -> vector<256x32xf32>
    %c0_10 = arith.constant 0 : index
    %c0_11 = arith.constant 0 : index
    %13 = vector.load %arg5[%c0_10, %c0_11] : memref<1x32xf32, #tpu.memory_space<vmem>>, vector<1x32xf32>
    %14 = vector.broadcast %13 : vector<1x32xf32> to vector<256x32xf32>
    %15 = arith.addf %12, %14 : vector<256x32xf32>
    %cst_12 = arith.constant 0.000000e+00 : f32
    %16 = vector.broadcast %cst_12 : f32 to vector<256x32xf32>
    %17 = arith.cmpf ogt, %15, %16 : vector<256x32xf32>
    %cst_13 = arith.constant 0.00999999977 : f32
    %18 = vector.broadcast %cst_13 : f32 to vector<256x32xf32>
    %19 = arith.mulf %18, %15 : vector<256x32xf32>
    %20 = arith.select %17, %15, %19 : vector<256x32xi1>, vector<256x32xf32>
    %c0_14 = arith.constant 0 : index
    %c0_15 = arith.constant 0 : index
    %21 = vector.load %arg6[%c0_14, %c0_15] : memref<8x32xf32, #tpu.memory_space<vmem>>, vector<8x32xf32>
    %cst_16 = arith.constant dense<0.000000e+00> : vector<8x256xf32>
    %22 = tpu.matmul %21, %20, %cst_16 {dimension_numbers = #tpu.dot_dimension_numbers<[1], [1], [0], [0], [0, 0, 1, 0], [], []>} : vector<8x32xf32>, vector<256x32xf32>, vector<8x256xf32> -> vector<8x256xf32>
    %c0_17 = arith.constant 0 : index
    %c0_18 = arith.constant 0 : index
    %23 = vector.load %arg7[%c0_17, %c0_18] : memref<8x1xf32, #tpu.memory_space<vmem>>, vector<8x1xf32>
    %24 = vector.broadcast %23 : vector<8x1xf32> to vector<8x256xf32>
    %25 = arith.addf %22, %24 : vector<8x256xf32>
    %c0_19 = arith.constant 0 : index
    %c0_20 = arith.constant 0 : index
    %26 = vector.load %arg8[%c0_19, %c0_20] : memref<8x256xf32, #tpu.memory_space<vmem>>, vector<8x256xf32>
    tpu.vector_store %arg8[%c0_19, %c0_20], %25 {strides = array<i32>} : memref<8x256xf32, #tpu.memory_space<vmem>>, vector<8x256xf32>,
    return
  }
  func.func @transform_0(%arg0: i32) -> (i32, i32) {
    %c0_i32 = arith.constant 0 : i32
    %c0_i32_0 = arith.constant 0 : i32
    return %arg0, %c0_i32 : i32, i32
  }
  func.func @transform_1(%arg0: i32) -> (i32, i32) {
    %c0_i32 = arith.constant 0 : i32
    %c0_i32_0 = arith.constant 0 : i32
    %c0_i32_1 = arith.constant 0 : i32
    return %c0_i32, %c0_i32_0 : i32, i32
  }
  func.func @transform_2(%arg0: i32) -> (i32, i32) {
    %c0_i32 = arith.constant 0 : i32
    %c0_i32_0 = arith.constant 0 : i32
    %c0_i32_1 = arith.constant 0 : i32
    return %c0_i32, %c0_i32_0 : i32, i32
  }
  func.func @transform_3(%arg0: i32) -> (i32, i32) {
    %c0_i32 = arith.constant 0 : i32
    %c0_i32_0 = arith.constant 0 : i32
    %c0_i32_1 = arith.constant 0 : i32
    return %c0_i32, %c0_i32_0 : i32, i32
  }
  func.func @transform_4(%arg0: i32) -> (i32, i32) {
    %c0_i32 = arith.constant 0 : i32
    %c0_i32_0 = arith.constant 0 : i32
    %c0_i32_1 = arith.constant 0 : i32
    return %c0_i32, %c0_i32_0 : i32, i32
  }
  func.func @transform_5(%arg0: i32) -> (i32, i32) {
    %c0_i32 = arith.constant 0 : i32
    %c0_i32_0 = arith.constant 0 : i32
    %c0_i32_1 = arith.constant 0 : i32
    return %c0_i32, %c0_i32_0 : i32, i32
  }
  func.func @transform_6(%arg0: i32) -> (i32, i32) {
    %c0_i32 = arith.constant 0 : i32
    %c0_i32_0 = arith.constant 0 : i32
    %c0_i32_1 = arith.constant 0 : i32
    return %c0_i32, %c0_i32_0 : i32, i32
  }
  func.func @transform_7(%arg0: i32) -> (i32, i32) {
    %c0_i32 = arith.constant 0 : i32
    %c0_i32_0 = arith.constant 0 : i32
    return %c0_i32, %arg0 : i32, i32
  }
}

</mosaic_0001>

<llo_original>
// kernel: tpu_custom_call.1
$region0: #{tpu_custom_call.1}
  #allocation0 [shape = 'u32[]', space=smem, size = 0x4, offset = 0x4, fixed_abs, tag = 'smem constant byte address 0x4 - core index']
  #allocation1 [shape = 'u32[72,128]{1,0:T(1,128)}', space=vmem, size = 0x9000, scoped, tag = 'internal scratch']
  %s0 = inlined_call_operand.vmem [shape: f32[512,32], index: 0, kind: input, shape index: {}]
  %s1 = inlined_call_operand.vmem [shape: f32[32,64], index: 1, kind: input, shape index: {}]
  %s2 = inlined_call_operand.vmem [shape: f32[1,64], index: 2, kind: input, shape index: {}]
  %s3 = inlined_call_operand.vmem [shape: f32[64,32], index: 3, kind: input, shape index: {}]
  %s4 = inlined_call_operand.vmem [shape: f32[1,32], index: 4, kind: input, shape index: {}]
  %s5 = inlined_call_operand.vmem [shape: f32[8,32], index: 5, kind: input, shape index: {}]
  %s6 = inlined_call_operand.vmem [shape: f32[8,1], index: 6, kind: input, shape index: {}]
  %s7 = inlined_call_operand.hbm [shape: f32[8,512], index: 7, kind: output, shape index: {}]
  %s8 = sld [smem:[#allocation0]]
  $region61: #{tpu_custom_call.1} parent=0
    _
  %s10 = ssub.s32 1, %s8
  %s11 = scalar_select 0, %s10, %s8
  $region1: #{tpu_custom_call.1} parent=0
    #allocation2 [shape = 'u8[16384]{0}', space=vmem, size = 0x4000, scoped, tag = 'output window, operand 0']
    #allocation3 [shape = 's32[2]{0}', space=sflag, size = 0x8, scoped, tag = 'scoped memory for tpu_custom_call.1']
    %12 = vsyncpa [#allocation3], 0
    %s13 = scalar_lea.sflag [#allocation3], 1
    %14 = vsyncpa %s13, 0
    loop: start=0, step=1, limit=4
    $region2: #{tpu_custom_call.1} parent=1 // loop_pre_header
      _
    $region3: #{tpu_custom_call.1} parent=1 // loop_header
      %s16 = sphi 0, %s20
      %p17 = scmp.ge.s32.totalorder %s16, 4
      %s26 = sphi 0, %s28
      %s29 = sphi 0, %s26
      %s30 = sphi 0, %s29
      %s46 = sphi 0, %s30
      %s50 = sphi 0, %s50
      %s52 = sphi 0, %s50
      %s53 = sphi 0, %s52
      %s67 = sphi 0, %s53
      %s71 = sphi 0, %s71
      %s73 = sphi 0, %s71
      %s74 = sphi 0, %s73
      %s88 = sphi 0, %s74
      %s92 = sphi 0, %s92
      %s94 = sphi 0, %s92
      %s95 = sphi 0, %s94
      %s109 = sphi 0, %s95
      %s113 = sphi 0, %s113
      %s115 = sphi 0, %s113
      %s116 = sphi 0, %s115
      %s130 = sphi 0, %s116
      %s134 = sphi 0, %s134
      %s136 = sphi 0, %s134
      %s137 = sphi 0, %s136
      %s151 = sphi 0, %s137
      %s155 = sphi 0, %s155
      %s157 = sphi 0, %s155
      %s158 = sphi 0, %s157
      %s172 = sphi 0, %s158
      %s178 = sphi 0, %s180
      %s181 = sphi 0, %s178
      %s182 = sphi 0, %s181
      %s198 = sphi 0, %s182
    $region4: #{tpu_custom_call.1} parent=1 // loop_header_branch
      %19 = sbr.rel (%p17) target = $region8
    $region5: #{tpu_custom_call.1} parent=1 // loop_body
      %s21 = ssub.s32 %s16, 1
      %s22 = ssub.s32 %s16, 2
      %s23 = sadd.s32 %s16, 1
      %s24 = ssub.s32 %s16, %s23
      %p25 = scmp.eq.s32.totalorder %s24, 0
      %s27 = sadd.s32 %s26, 1
      %s28 = scalar_select %p25, %s26, %s27
      %p31 = pneg %p25
      %p32 = scmp.eq.s32.totalorder %s16, 1
      %p33 = por %p31, %p32
      %p34 = scmp.ne.s32.totalorder %s26, %s29
      %p35 = scmp.eq.s32.totalorder %s16, 0
      %p36 = por %p34, %p35
      %p37 = scmp.ne.s32.totalorder %s26, %s29
      %p38 = scmp.eq.s32.totalorder %s21, 1
      %p39 = por %p37, %p38
      %p40 = scmp.ne.s32.totalorder %s29, %s30
      %p41 = scmp.eq.s32.totalorder %s21, 0
      %p42 = por %p40, %p41
      %p43 = scmp.ne.s32.totalorder %s29, %s30
      %p44 = scmp.eq.s32.totalorder %s22, 1
      %p45 = por %p43, %p44
      %p47 = scmp.ne.s32.totalorder %s30, %s46
      %p48 = scmp.eq.s32.totalorder %s22, 0
      %p49 = por %p47, %p48
      %s51 = sadd.s32 %s50, 1
      %p54 = scmp.eq.s32.totalorder %s16, 1
      %p55 = scmp.ne.s32.totalorder %s50, %s52
      %p56 = scmp.eq.s32.totalorder %s16, 0
      %p57 = por %p55, %p56
      %p58 = scmp.ne.s32.totalorder %s50, %s52
      %p59 = scmp.eq.s32.totalorder %s21, 1
      %p60 = por %p58, %p59
      %p61 = scmp.ne.s32.totalorder %s52, %s53
      %p62 = scmp.eq.s32.totalorder %s21, 0
      %p63 = por %p61, %p62
      %p64 = scmp.ne.s32.totalorder %s52, %s53
      %p65 = scmp.eq.s32.totalorder %s22, 1
      %p66 = por %p64, %p65
      %p68 = scmp.ne.s32.totalorder %s53, %s67
      %p69 = scmp.eq.s32.totalorder %s22, 0
      %p70 = por %p68, %p69
      %s72 = sadd.s32 %s71, 1
      %p75 = scmp.eq.s32.totalorder %s16, 1
      %p76 = scmp.ne.s32.totalorder %s71, %s73
      %p77 = scmp.eq.s32.totalorder %s16, 0
      %p78 = por %p76, %p77
      %p79 = scmp.ne.s32.totalorder %s71, %s73
      %p80 = scmp.eq.s32.totalorder %s21, 1
      %p81 = por %p79, %p80
      %p82 = scmp.ne.s32.totalorder %s73, %s74
      %p83 = scmp.eq.s32.totalorder %s21, 0
      %p84 = por %p82, %p83
      %p85 = scmp.ne.s32.totalorder %s73, %s74
      %p86 = scmp.eq.s32.totalorder %s22, 1
      %p87 = por %p85, %p86
      %p89 = scmp.ne.s32.totalorder %s74, %s88
      %p90 = scmp.eq.s32.totalorder %s22, 0
      %p91 = por %p89, %p90
      %s93 = sadd.s32 %s92, 1
      %p96 = scmp.eq.s32.totalorder %s16, 1
      %p97 = scmp.ne.s32.totalorder %s92, %s94
      %p98 = scmp.eq.s32.totalorder %s16, 0
      %p99 = por %p97, %p98
      %p100 = scmp.ne.s32.totalorder %s92, %s94
      %p101 = scmp.eq.s32.totalorder %s21, 1
      %p102 = por %p100, %p101
      %p103 = scmp.ne.s32.totalorder %s94, %s95
      %p104 = scmp.eq.s32.totalorder %s21, 0
      %p105 = por %p103, %p104
      %p106 = scmp.ne.s32.totalorder %s94, %s95
      %p107 = scmp.eq.s32.totalorder %s22, 1
      %p108 = por %p106, %p107
      %p110 = scmp.ne.s32.totalorder %s95, %s109
      %p111 = scmp.eq.s32.totalorder %s22, 0
      %p112 = por %p110, %p111
      %s114 = sadd.s32 %s113, 1
      %p117 = scmp.eq.s32.totalorder %s16, 1
      %p118 = scmp.ne.s32.totalorder %s113, %s115
      %p119 = scmp.eq.s32.totalorder %s16, 0
      %p120 = por %p118, %p119
      %p121 = scmp.ne.s32.totalorder %s113, %s115
      %p122 = scmp.eq.s32.totalorder %s21, 1
      %p123 = por %p121, %p122
      %p124 = scmp.ne.s32.totalorder %s115, %s116
      %p125 = scmp.eq.s32.totalorder %s21, 0
      %p126 = por %p124, %p125
      %p127 = scmp.ne.s32.totalorder %s115, %s116
      %p128 = scmp.eq.s32.totalorder %s22, 1
      %p129 = por %p127, %p128
      %p131 = scmp.ne.s32.totalorder %s116, %s130
      %p132 = scmp.eq.s32.totalorder %s22, 0
      %p133 = por %p131, %p132
      %s135 = sadd.s32 %s134, 1
      %p138 = scmp.eq.s32.totalorder %s16, 1
      %p139 = scmp.ne.s32.totalorder %s134, %s136
      %p140 = scmp.eq.s32.totalorder %s16, 0
      %p141 = por %p139, %p140
      %p142 = scmp.ne.s32.totalorder %s134, %s136
      %p143 = scmp.eq.s32.totalorder %s21, 1
      %p144 = por %p142, %p143
      %p145 = scmp.ne.s32.totalorder %s136, %s137
      %p146 = scmp.eq.s32.totalorder %s21, 0
      %p147 = por %p145, %p146
      %p148 = scmp.ne.s32.totalorder %s136, %s137
      %p149 = scmp.eq.s32.totalorder %s22, 1
      %p150 = por %p148, %p149
      %p152 = scmp.ne.s32.totalorder %s137, %s151
      %p153 = scmp.eq.s32.totalorder %s22, 0
      %p154 = por %p152, %p153
      %s156 = sadd.s32 %s155, 1
      %p159 = scmp.eq.s32.totalorder %s16, 1
      %p160 = scmp.ne.s32.totalorder %s155, %s157
      %p161 = scmp.eq.s32.totalorder %s16, 0
      %p162 = por %p160, %p161
      %p163 = scmp.ne.s32.totalorder %s155, %s157
      %p164 = scmp.eq.s32.totalorder %s21, 1
      %p165 = por %p163, %p164
      %p166 = scmp.ne.s32.totalorder %s157, %s158
      %p167 = scmp.eq.s32.totalorder %s21, 0
      %p168 = por %p166, %p167
      %p169 = scmp.ne.s32.totalorder %s157, %s158
      %p170 = scmp.eq.s32.totalorder %s22, 1
      %p171 = por %p169, %p170
      %p173 = scmp.ne.s32.totalorder %s158, %s172
      %p174 = scmp.eq.s32.totalorder %s22, 0
      %p175 = por %p173, %p174
      %s176 = ssub.s32 %s16, %s23
      %p177 = scmp.eq.s32.totalorder %s176, 0
      %s179 = sadd.s32 %s178, 1
      %s180 = scalar_select %p177, %s178, %s179
      %p183 = pneg %p177
      %p184 = scmp.eq.s32.totalorder %s16, 1
      %p185 = por %p183, %p184
      %p186 = scmp.ne.s32.totalorder %s178, %s181
      %p187 = scmp.eq.s32.totalorder %s16, 0
      %p188 = por %p186, %p187
      %p189 = scmp.ne.s32.totalorder %s178, %s181
      %p190 = scmp.eq.s32.totalorder %s21, 1
      %p191 = por %p189, %p190
      %p192 = scmp.ne.s32.totalorder %s181, %s182
      %p193 = scmp.eq.s32.totalorder %s21, 0
      %p194 = por %p192, %p193
      %p195 = scmp.ne.s32.totalorder %s181, %s182
      %p196 = scmp.eq.s32.totalorder %s22, 1
      %p197 = por %p195, %p196
      %p199 = scmp.ne.s32.totalorder %s182, %s198
      %p200 = scmp.eq.s32.totalorder %s22, 0
      %p201 = por %p199, %p200
      %p202 = scmp.le.s32.totalorder 1, %s16
      %p203 = scmp.lt.s32.totalorder %s16, 3
      %p204 = pnand %p202, %p203
      %p205 = pneg %p204
      // Predicated region
      $region9: #{tpu_custom_call.1} parent=5 // pred_check
        _
      $region10: #{tpu_custom_call.1} parent=5 // pred_check_branch
        %207 = sbr.rel (%p204) target = $region12
      $region11: #{tpu_custom_call.1} parent=5 // pred_region
        %s208 = ssub.s32 %s16, 1
        // Predicated region
        $region13: #{tpu_custom_call.1} parent=11 // pred_check
          %p209 = pneg %p63
        $region14: #{tpu_custom_call.1} parent=11 // pred_check_branch
          %211 = sbr.rel (%p209) target = $region16
        $region15: #{tpu_custom_call.1} parent=11 // pred_region
          _
        $region16: #{tpu_custom_call.1} parent=11 // pred_fallthru
          _
        // Predicated region
        $region17: #{tpu_custom_call.1} parent=11 // pred_check
          %p212 = pneg %p84
        $region18: #{tpu_custom_call.1} parent=11 // pred_check_branch
          %214 = sbr.rel (%p212) target = $region20
        $region19: #{tpu_custom_call.1} parent=11 // pred_region
          _
        $region20: #{tpu_custom_call.1} parent=11 // pred_fallthru
          _
        // Predicated region
        $region21: #{tpu_custom_call.1} parent=11 // pred_check
          %p215 = pneg %p105
        $region22: #{tpu_custom_call.1} parent=11 // pred_check_branch
          %217 = sbr.rel (%p215) target = $region24
        $region23: #{tpu_custom_call.1} parent=11 // pred_region
          _
        $region24: #{tpu_custom_call.1} parent=11 // pred_fallthru
          _
        // Predicated region
        $region25: #{tpu_custom_call.1} parent=11 // pred_check
          %p218 = pneg %p126
        $region26: #{tpu_custom_call.1} parent=11 // pred_check_branch
          %220 = sbr.rel (%p218) target = $region28
        $region27: #{tpu_custom_call.1} parent=11 // pred_region
          _
        $region28: #{tpu_custom_call.1} parent=11 // pred_fallthru
          _
        // Predicated region
        $region29: #{tpu_custom_call.1} parent=11 // pred_check
          %p221 = pneg %p147
        $region30: #{tpu_custom_call.1} parent=11 // pred_check_branch
          %223 = sbr.rel (%p221) target = $region32
        $region31: #{tpu_custom_call.1} parent=11 // pred_region
          _
        $region32: #{tpu_custom_call.1} parent=11 // pred_fallthru
          _
        // Predicated region
        $region33: #{tpu_custom_call.1} parent=11 // pred_check
          %p224 = pneg %p168
        $region34: #{tpu_custom_call.1} parent=11 // pred_check_branch
          %226 = sbr.rel (%p224) target = $region36
        $region35: #{tpu_custom_call.1} parent=11 // pred_region
          _
        $region36: #{tpu_custom_call.1} parent=11 // pred_fallthru
          _
      $region12: #{tpu_custom_call.1} parent=5 // pred_fallthru
        _
      %p227 = scmp.lt.s32.totalorder %s16, 2
      // Predicated region
      $region37: #{tpu_custom_call.1} parent=5 // pred_check
        %p228 = pneg %p227
      $region38: #{tpu_custom_call.1} parent=5 // pred_check_branch
        %230 = sbr.rel (%p228) target = $region40
      $region39: #{tpu_custom_call.1} parent=5 // pred_region
        // Predicated region
        $region41: #{tpu_custom_call.1} parent=39 // pred_check
          %p231 = pneg %p36
        $region42: #{tpu_custom_call.1} parent=39 // pred_check_branch
          %233 = sbr.rel (%p231) target = $region44
        $region43: #{tpu_custom_call.1} parent=39 // pred_region
          %s234 = smul.u32 32, %s16
          %p235 = scmp.lt.s32.totalorder %s234, 63
          %s236 = scalar_select %p235, %s234, 63
          %s237 = smul.addr %s236, 8
          %s238 = scalar_lea.vmem %s0, %s237
          %s239 = smul.u32 32, %s16
        $region44: #{tpu_custom_call.1} parent=39 // pred_fallthru
          _
      $region40: #{tpu_custom_call.1} parent=5 // pred_fallthru
        _
      %p240 = scmp.le.s32.totalorder 1, %s16
      %p241 = scmp.lt.s32.totalorder %s16, 3
      %p242 = pnand %p240, %p241
      %p243 = pneg %p242
      // Predicated region
      $region45: #{tpu_custom_call.1} parent=5 // pred_check
        _
      $region46: #{tpu_custom_call.1} parent=5 // pred_check_branch
        %245 = sbr.rel (%p242) target = $region48
      $region47: #{tpu_custom_call.1} parent=5 // pred_region
        %s246 = ssub.s32 %s16, 1
        %s247 = smul.u32 32, %s21
        %p248 = scmp.lt.s32.totalorder %s247, 63
        %s249 = scalar_select %p248, %s247, 63
        %s250 = smul.addr %s249, 8
        %s251 = scalar_lea.vmem %s0, %s250
        %p252 = pneg %p42
        %p253 = pneg %p39
        %p254 = pneg %p63
        %p255 = pneg %p60
        %p256 = pneg %p84
        %p257 = pneg %p81
        %p258 = pneg %p105
        %p259 = pneg %p102
        %p260 = pneg %p126
        %p261 = pneg %p123
        %p262 = pneg %p147
        %p263 = pneg %p144
        %p264 = pneg %p168
        %p265 = pneg %p165
        %p266 = pneg %p194
        %p267 = pneg %p191
        %s268 = sand.u32 %s181, 1
        %s269 = scalar_lea.sflag [#allocation3], %s268
        %s270 = sand.u32 %s181, 1
        %s271 = smul.addr %s270, 16
        %s272 = scalar_lea.vmem [#allocation2], %s271
        %s273 = smul.u32 32, %s21
        %p274 = scmp.lt.s32.totalorder %s273, 63
        %s275 = scalar_select %p274, %s273, 63
        %s276 = smul.addr %s275, 8
        %s277 = scalar_lea.vmem %s0, %s276
        %s278 = smul.u32 32, %s21
        %s279 = smul.u32 2, %s21
        %v280 = vld [vmem:[%s277] sm:$0xff]
        %v281 = vld [vmem:[%s277 + $0x8] sm:$0xff]
        %v282 = vld [vmem:[%s277 + $0x10] sm:$0xff]
        %v283 = vld [vmem:[%s277 + $0x18] sm:$0xff]
        %v284 = vld [vmem:[%s277 + $0x20] sm:$0xff]
        %v285 = vld [vmem:[%s277 + $0x28] sm:$0xff]
        %v286 = vld [vmem:[%s277 + $0x30] sm:$0xff]
        %v287 = vld [vmem:[%s277 + $0x38] sm:$0xff]
        %v288 = vld [vmem:[%s277 + $0x40] sm:$0xff]
        %v289 = vld [vmem:[%s277 + $0x48] sm:$0xff]
        %v290 = vld [vmem:[%s277 + $0x50] sm:$0xff]
        %v291 = vld [vmem:[%s277 + $0x58] sm:$0xff]
        %v292 = vld [vmem:[%s277 + $0x60] sm:$0xff]
        %v293 = vld [vmem:[%s277 + $0x68] sm:$0xff]
        %v294 = vld [vmem:[%s277 + $0x70] sm:$0xff]
        %v295 = vld [vmem:[%s277 + $0x78] sm:$0xff]
        %v296 = vld [vmem:[%s277 + $0x80] sm:$0xff]
        %v297 = vld [vmem:[%s277 + $0x88] sm:$0xff]
        %v298 = vld [vmem:[%s277 + $0x90] sm:$0xff]
        %v299 = vld [vmem:[%s277 + $0x98] sm:$0xff]
        %v300 = vld [vmem:[%s277 + $0xa0] sm:$0xff]
        %v301 = vld [vmem:[%s277 + $0xa8] sm:$0xff]
        %v302 = vld [vmem:[%s277 + $0xb0] sm:$0xff]
        %v303 = vld [vmem:[%s277 + $0xb8] sm:$0xff]
        %v304 = vld [vmem:[%s277 + $0xc0] sm:$0xff]
        %v305 = vld [vmem:[%s277 + $0xc8] sm:$0xff]
        %v306 = vld [vmem:[%s277 + $0xd0] sm:$0xff]
        %v307 = vld [vmem:[%s277 + $0xd8] sm:$0xff]
        %v308 = vld [vmem:[%s277 + $0xe0] sm:$0xff]
        %v309 = vld [vmem:[%s277 + $0xe8] sm:$0xff]
        %v310 = vld [vmem:[%s277 + $0xf0] sm:$0xff]
        %v311 = vld [vmem:[%s277 + $0xf8] sm:$0xff]
        %v312 = vld [vmem:[%s1] sm:$0xff]
        %v313 = vld [vmem:[%s1 + $0x8] sm:$0xff]
        %v314 = vld [vmem:[%s1 + $0x10] sm:$0xff]
        %v315 = vld [vmem:[%s1 + $0x18] sm:$0xff]
        %v316 = vld [vmem:[%s2] sm:$0x1]
        %v318 = vperm.slane %v316, 0
        %vm320 = vcmask 261120
        %v322 = vsel %vm320, %v280, 0
        %v325 = vsel %vm320, %v281, 0
        %v328 = vsel %vm320, %v282, 0
        %v331 = vsel %vm320, %v283, 0
        %v334 = vsel %vm320, %v284, 0
        %v337 = vsel %vm320, %v285, 0
        %v340 = vsel %vm320, %v286, 0
        %v343 = vsel %vm320, %v287, 0
        %v346 = vsel %vm320, %v288, 0
        %v349 = vsel %vm320, %v289, 0
        %v352 = vsel %vm320, %v290, 0
        %v355 = vsel %vm320, %v291, 0
        %v358 = vsel %vm320, %v292, 0
        %v361 = vsel %vm320, %v293, 0
        %v364 = vsel %vm320, %v294, 0
        %v367 = vsel %vm320, %v295, 0
        %v370 = vsel %vm320, %v296, 0
        %v373 = vsel %vm320, %v297, 0
        %v376 = vsel %vm320, %v298, 0
        %v379 = vsel %vm320, %v299, 0
        %v382 = vsel %vm320, %v300, 0
        %v385 = vsel %vm320, %v301, 0
        %v388 = vsel %vm320, %v302, 0
        %v391 = vsel %vm320, %v303, 0
        %v394 = vsel %vm320, %v304, 0
        %v397 = vsel %vm320, %v305, 0
        %v400 = vsel %vm320, %v306, 0
        %v403 = vsel %vm320, %v307, 0
        %v406 = vsel %vm320, %v308, 0
        %v409 = vsel %vm320, %v309, 0
        %v412 = vsel %vm320, %v310, 0
        %v415 = vsel %vm320, %v311, 0
        %417 = vmatpush.msra.mxu0 0.0
        %418 = vmatpush.msra.mxu0 0.0
        %419 = vmatpush.msra.mxu0 0.0
        %420 = vmatpush.msra.mxu0 0.0
        %421 = vmatpush.msra.mxu0 0.0
        %422 = vmatpush.msra.mxu0 0.0
        %423 = vmatpush.msra.mxu0 0.0
        %424 = vmatpush.msra.mxu0 0.0
        %425 = vmatpush.msra.mxu0 0.0
        %426 = vmatpush.msra.mxu0 0.0
        %427 = vmatpush.msra.mxu0 0.0
        %428 = vmatpush.msra.mxu0 0.0
        %429 = vmatpush.msra.mxu0 %v315
        %430 = vmatpush.msra.mxu0 %v314
        %431 = vmatpush.msra.mxu0 %v313
        %432 = vmatpush.msra.mxu0 %v312
        %433 = vmatmul.f32.gmra.mxu0 %v322
        %v434 = vpop.f32.mrf.mxu0
        %v435 = vadd.f32 %v318, %v434
        %436 = vmatmul.f32.gmra.mxu0 %v325
        %v437 = vpop.f32.mrf.mxu0
        %v438 = vadd.f32 %v318, %v437
        %439 = vmatmul.f32.gmra.mxu0 %v328
        %v440 = vpop.f32.mrf.mxu0
        %v441 = vadd.f32 %v318, %v440
        %442 = vmatmul.f32.gmra.mxu0 %v331
        %v443 = vpop.f32.mrf.mxu0
        %v444 = vadd.f32 %v318, %v443
        %445 = vmatmul.f32.gmra.mxu0 %v334
        %v446 = vpop.f32.mrf.mxu0
        %v447 = vadd.f32 %v318, %v446
        %448 = vmatmul.f32.gmra.mxu0 %v337
        %v449 = vpop.f32.mrf.mxu0
        %v450 = vadd.f32 %v318, %v449
        %451 = vmatmul.f32.gmra.mxu0 %v340
        %v452 = vpop.f32.mrf.mxu0
        %v453 = vadd.f32 %v318, %v452
        %454 = vmatmul.f32.gmra.mxu0 %v343
        %v455 = vpop.f32.mrf.mxu0
        %v456 = vadd.f32 %v318, %v455
        %457 = vmatmul.f32.gmra.mxu0 %v346
        %v458 = vpop.f32.mrf.mxu0
        %v459 = vadd.f32 %v318, %v458
        %460 = vmatmul.f32.gmra.mxu0 %v349
        %v461 = vpop.f32.mrf.mxu0
        %v462 = vadd.f32 %v318, %v461
        %463 = vmatmul.f32.gmra.mxu0 %v352
        %v464 = vpop.f32.mrf.mxu0
        %v465 = vadd.f32 %v318, %v464
        %466 = vmatmul.f32.gmra.mxu0 %v355
        %v467 = vpop.f32.mrf.mxu0
        %v468 = vadd.f32 %v318, %v467
        %469 = vmatmul.f32.gmra.mxu0 %v358
        %v470 = vpop.f32.mrf.mxu0
        %v471 = vadd.f32 %v318, %v470
        %472 = vmatmul.f32.gmra.mxu0 %v361
        %v473 = vpop.f32.mrf.mxu0
        %v474 = vadd.f32 %v318, %v473
        %475 = vmatmul.f32.gmra.mxu0 %v364
        %v476 = vpop.f32.mrf.mxu0
        %v477 = vadd.f32 %v318, %v476
        %478 = vmatmul.f32.gmra.mxu0 %v367
        %v479 = vpop.f32.mrf.mxu0
        %v480 = vadd.f32 %v318, %v479
        %481 = vmatmul.f32.gmra.mxu0 %v370
        %v482 = vpop.f32.mrf.mxu0
        %v483 = vadd.f32 %v318, %v482
        %484 = vmatmul.f32.gmra.mxu0 %v373
        %v485 = vpop.f32.mrf.mxu0
        %v486 = vadd.f32 %v318, %v485
        %487 = vmatmul.f32.gmra.mxu0 %v376
        %v488 = vpop.f32.mrf.mxu0
        %v489 = vadd.f32 %v318, %v488
        %490 = vmatmul.f32.gmra.mxu0 %v379
        %v491 = vpop.f32.mrf.mxu0
        %v492 = vadd.f32 %v318, %v491
        %493 = vmatmul.f32.gmra.mxu0 %v382
        %v494 = vpop.f32.mrf.mxu0
        %v495 = vadd.f32 %v318, %v494
        %496 = vmatmul.f32.gmra.mxu0 %v385
        %v497 = vpop.f32.mrf.mxu0
        %v498 = vadd.f32 %v318, %v497
        %499 = vmatmul.f32.gmra.mxu0 %v388
        %v500 = vpop.f32.mrf.mxu0
        %v501 = vadd.f32 %v318, %v500
        %502 = vmatmul.f32.gmra.mxu0 %v391
        %v503 = vpop.f32.mrf.mxu0
        %v504 = vadd.f32 %v318, %v503
        %505 = vmatmul.f32.gmra.mxu0 %v394
        %v506 = vpop.f32.mrf.mxu0
        %v507 = vadd.f32 %v318, %v506
        %508 = vmatmul.f32.gmra.mxu0 %v397
        %v509 = vpop.f32.mrf.mxu0
        %v510 = vadd.f32 %v318, %v509
        %511 = vmatmul.f32.gmra.mxu0 %v400
        %v512 = vpop.f32.mrf.mxu0
        %v513 = vadd.f32 %v318, %v512
        %514 = vmatmul.f32.gmra.mxu0 %v403
        %v515 = vpop.f32.mrf.mxu0
        %v516 = vadd.f32 %v318, %v515
        %517 = vmatmul.f32.gmra.mxu0 %v406
        %v518 = vpop.f32.mrf.mxu0
        %v519 = vadd.f32 %v318, %v518
        %520 = vmatmul.f32.gmra.mxu0 %v409
        %v521 = vpop.f32.mrf.mxu0
        %v522 = vadd.f32 %v318, %v521
        %523 = vmatmul.f32.gmra.mxu0 %v412
        %v524 = vpop.f32.mrf.mxu0
        %v525 = vadd.f32 %v318, %v524
        %526 = vmatmul.f32.gmra.mxu0 %v415
        %v527 = vpop.f32.mrf.mxu0
        %v528 = vadd.f32 %v318, %v527
        %529 = vdwg.mxu0
        %vm530 = vcmp.gt.f32.partialorder %v435, 0.0
        %vm531 = vcmp.gt.f32.partialorder %v438, 0.0
        %vm532 = vcmp.gt.f32.partialorder %v441, 0.0
        %vm533 = vcmp.gt.f32.partialorder %v444, 0.0
        %vm534 = vcmp.gt.f32.partialorder %v447, 0.0
        %vm535 = vcmp.gt.f32.partialorder %v450, 0.0
        %vm536 = vcmp.gt.f32.partialorder %v453, 0.0
        %vm537 = vcmp.gt.f32.partialorder %v456, 0.0
        %vm538 = vcmp.gt.f32.partialorder %v459, 0.0
        %vm539 = vcmp.gt.f32.partialorder %v462, 0.0
        %vm540 = vcmp.gt.f32.partialorder %v465, 0.0
        %vm541 = vcmp.gt.f32.partialorder %v468, 0.0
        %vm542 = vcmp.gt.f32.partialorder %v471, 0.0
        %vm543 = vcmp.gt.f32.partialorder %v474, 0.0
        %vm544 = vcmp.gt.f32.partialorder %v477, 0.0
        %vm545 = vcmp.gt.f32.partialorder %v480, 0.0
        %vm546 = vcmp.gt.f32.partialorder %v483, 0.0
        %vm547 = vcmp.gt.f32.partialorder %v486, 0.0
        %vm548 = vcmp.gt.f32.partialorder %v489, 0.0
        %vm549 = vcmp.gt.f32.partialorder %v492, 0.0
        %vm550 = vcmp.gt.f32.partialorder %v495, 0.0
        %vm551 = vcmp.gt.f32.partialorder %v498, 0.0
        %vm552 = vcmp.gt.f32.partialorder %v501, 0.0
        %vm553 = vcmp.gt.f32.partialorder %v504, 0.0
        %vm554 = vcmp.gt.f32.partialorder %v507, 0.0
        %vm555 = vcmp.gt.f32.partialorder %v510, 0.0
        %vm556 = vcmp.gt.f32.partialorder %v513, 0.0
        %vm557 = vcmp.gt.f32.partialorder %v516, 0.0
        %vm558 = vcmp.gt.f32.partialorder %v519, 0.0
        %vm559 = vcmp.gt.f32.partialorder %v522, 0.0
        %vm560 = vcmp.gt.f32.partialorder %v525, 0.0
        %vm561 = vcmp.gt.f32.partialorder %v528, 0.0
        %v562 = vmul.f32 %v435, 0.01
        %v563 = vmul.f32 %v438, 0.01
        %v564 = vmul.f32 %v441, 0.01
        %v565 = vmul.f32 %v444, 0.01
        %v566 = vmul.f32 %v447, 0.01
        %v567 = vmul.f32 %v450, 0.01
        %v568 = vmul.f32 %v453, 0.01
        %v569 = vmul.f32 %v456, 0.01
        %v570 = vmul.f32 %v459, 0.01
        %v571 = vmul.f32 %v462, 0.01
        %v572 = vmul.f32 %v465, 0.01
        %v573 = vmul.f32 %v468, 0.01
        %v574 = vmul.f32 %v471, 0.01
        %v575 = vmul.f32 %v474, 0.01
        %v576 = vmul.f32 %v477, 0.01
        %v577 = vmul.f32 %v480, 0.01
        %v578 = vmul.f32 %v483, 0.01
        %v579 = vmul.f32 %v486, 0.01
        %v580 = vmul.f32 %v489, 0.01
        %v581 = vmul.f32 %v492, 0.01
        %v582 = vmul.f32 %v495, 0.01
        %v583 = vmul.f32 %v498, 0.01
        %v584 = vmul.f32 %v501, 0.01
        %v585 = vmul.f32 %v504, 0.01
        %v586 = vmul.f32 %v507, 0.01
        %v587 = vmul.f32 %v510, 0.01
        %v588 = vmul.f32 %v513, 0.01
        %v589 = vmul.f32 %v516, 0.01
        %v590 = vmul.f32 %v519, 0.01
        %v591 = vmul.f32 %v522, 0.01
        %v592 = vmul.f32 %v525, 0.01
        %v593 = vmul.f32 %v528, 0.01
        %v594 = vsel %vm530, %v435, %v562
        %v595 = vsel %vm531, %v438, %v563
        %v596 = vsel %vm532, %v441, %v564
        %v597 = vsel %vm533, %v444, %v565
        %v598 = vsel %vm534, %v447, %v566
        %v599 = vsel %vm535, %v450, %v567
        %v600 = vsel %vm536, %v453, %v568
        %v601 = vsel %vm537, %v456, %v569
        %v602 = vsel %vm538, %v459, %v570
        %v603 = vsel %vm539, %v462, %v571
        %v604 = vsel %vm540, %v465, %v572
        %v605 = vsel %vm541, %v468, %v573
        %v606 = vsel %vm542, %v471, %v574
        %v607 = vsel %vm543, %v474, %v575
        %v608 = vsel %vm544, %v477, %v576
        %v609 = vsel %vm545, %v480, %v577
        %v610 = vsel %vm546, %v483, %v578
        %v611 = vsel %vm547, %v486, %v579
        %v612 = vsel %vm548, %v489, %v580
        %v613 = vsel %vm549, %v492, %v581
        %v614 = vsel %vm550, %v495, %v582
        %v615 = vsel %vm551, %v498, %v583
        %v616 = vsel %vm552, %v501, %v584
        %v617 = vsel %vm553, %v504, %v585
        %v618 = vsel %vm554, %v507, %v586
        %v619 = vsel %vm555, %v510, %v587
        %v620 = vsel %vm556, %v513, %v588
        %v621 = vsel %vm557, %v516, %v589
        %v622 = vsel %vm558, %v519, %v590
        %v623 = vsel %vm559, %v522, %v591
        %v624 = vsel %vm560, %v525, %v592
        %v625 = vsel %vm561, %v528, %v593
        %v626 = vld [vmem:[%s3] sm:$0xff]
        %v627 = vld [vmem:[%s3 + $0x8] sm:$0xff]
        %v628 = vld [vmem:[%s3 + $0x10] sm:$0xff]
        %v629 = vld [vmem:[%s3 + $0x18] sm:$0xff]
        %v630 = vld [vmem:[%s3 + $0x20] sm:$0xff]
        %v631 = vld [vmem:[%s3 + $0x28] sm:$0xff]
        %v632 = vld [vmem:[%s3 + $0x30] sm:$0xff]
        %v633 = vld [vmem:[%s3 + $0x38] sm:$0xff]
        %v634 = vld [vmem:[%s4] sm:$0x1]
        %v636 = vperm.slane %v634, 0
        %vm638 = vcmask 523264
        %v640 = vsel %vm638, %v594, 0
        %v643 = vsel %vm638, %v595, 0
        %v646 = vsel %vm638, %v596, 0
        %v649 = vsel %vm638, %v597, 0
        %v652 = vsel %vm638, %v598, 0
        %v655 = vsel %vm638, %v599, 0
        %v658 = vsel %vm638, %v600, 0
        %v661 = vsel %vm638, %v601, 0
        %v664 = vsel %vm638, %v602, 0
        %v667 = vsel %vm638, %v603, 0
        %v670 = vsel %vm638, %v604, 0
        %v673 = vsel %vm638, %v605, 0
        %v676 = vsel %vm638, %v606, 0
        %v679 = vsel %vm638, %v607, 0
        %v682 = vsel %vm638, %v608, 0
        %v685 = vsel %vm638, %v609, 0
        %v688 = vsel %vm638, %v610, 0
        %v691 = vsel %vm638, %v611, 0
        %v694 = vsel %vm638, %v612, 0
        %v697 = vsel %vm638, %v613, 0
        %v700 = vsel %vm638, %v614, 0
        %v703 = vsel %vm638, %v615, 0
        %v706 = vsel %vm638, %v616, 0
        %v709 = vsel %vm638, %v617, 0
        %v712 = vsel %vm638, %v618, 0
        %v715 = vsel %vm638, %v619, 0
        %v718 = vsel %vm638, %v620, 0
        %v721 = vsel %vm638, %v621, 0
        %v724 = vsel %vm638, %v622, 0
        %v727 = vsel %vm638, %v623, 0
        %v730 = vsel %vm638, %v624, 0
        %v733 = vsel %vm638, %v625, 0
        %735 = vmatpush.msra.mxu0 0.0
        %736 = vmatpush.msra.mxu0 0.0
        %737 = vmatpush.msra.mxu0 0.0
        %738 = vmatpush.msra.mxu0 0.0
        %739 = vmatpush.msra.mxu0 0.0
        %740 = vmatpush.msra.mxu0 0.0
        %741 = vmatpush.msra.mxu0 0.0
        %742 = vmatpush.msra.mxu0 0.0
        %743 = vmatpush.msra.mxu0 %v633
        %744 = vmatpush.msra.mxu0 %v632
        %745 = vmatpush.msra.mxu0 %v631
        %746 = vmatpush.msra.mxu0 %v630
        %747 = vmatpush.msra.mxu0 %v629
        %748 = vmatpush.msra.mxu0 %v628
        %749 = vmatpush.msra.mxu0 %v627
        %750 = vmatpush.msra.mxu0 %v626
        %751 = vmatmul.f32.gmra.mxu0 %v640
        %v752 = vpop.f32.mrf.mxu0
        %v753 = vadd.f32 %v636, %v752
        %754 = vmatmul.f32.gmra.mxu0 %v643
        %v755 = vpop.f32.mrf.mxu0
        %v756 = vadd.f32 %v636, %v755
        %757 = vmatmul.f32.gmra.mxu0 %v646
        %v758 = vpop.f32.mrf.mxu0
        %v759 = vadd.f32 %v636, %v758
        %760 = vmatmul.f32.gmra.mxu0 %v649
        %v761 = vpop.f32.mrf.mxu0
        %v762 = vadd.f32 %v636, %v761
        %763 = vmatmul.f32.gmra.mxu0 %v652
        %v764 = vpop.f32.mrf.mxu0
        %v765 = vadd.f32 %v636, %v764
        %766 = vmatmul.f32.gmra.mxu0 %v655
        %v767 = vpop.f32.mrf.mxu0
        %v768 = vadd.f32 %v636, %v767
        %769 = vmatmul.f32.gmra.mxu0 %v658
        %v770 = vpop.f32.mrf.mxu0
        %v771 = vadd.f32 %v636, %v770
        %772 = vmatmul.f32.gmra.mxu0 %v661
        %v773 = vpop.f32.mrf.mxu0
        %v774 = vadd.f32 %v636, %v773
        %775 = vmatmul.f32.gmra.mxu0 %v664
        %v776 = vpop.f32.mrf.mxu0
        %v777 = vadd.f32 %v636, %v776
        %778 = vmatmul.f32.gmra.mxu0 %v667
        %v779 = vpop.f32.mrf.mxu0
        %v780 = vadd.f32 %v636, %v779
        %781 = vmatmul.f32.gmra.mxu0 %v670
        %v782 = vpop.f32.mrf.mxu0
        %v783 = vadd.f32 %v636, %v782
        %784 = vmatmul.f32.gmra.mxu0 %v673
        %v785 = vpop.f32.mrf.mxu0
        %v786 = vadd.f32 %v636, %v785
        %787 = vmatmul.f32.gmra.mxu0 %v676
        %v788 = vpop.f32.mrf.mxu0
        %v789 = vadd.f32 %v636, %v788
        %790 = vmatmul.f32.gmra.mxu0 %v679
        %v791 = vpop.f32.mrf.mxu0
        %v792 = vadd.f32 %v636, %v791
        %793 = vmatmul.f32.gmra.mxu0 %v682
        %v794 = vpop.f32.mrf.mxu0
        %v795 = vadd.f32 %v636, %v794
        %796 = vmatmul.f32.gmra.mxu0 %v685
        %v797 = vpop.f32.mrf.mxu0
        %v798 = vadd.f32 %v636, %v797
        %799 = vmatmul.f32.gmra.mxu0 %v688
        %v800 = vpop.f32.mrf.mxu0
        %v801 = vadd.f32 %v636, %v800
        %802 = vmatmul.f32.gmra.mxu0 %v691
        %v803 = vpop.f32.mrf.mxu0
        %v804 = vadd.f32 %v636, %v803
        %805 = vmatmul.f32.gmra.mxu0 %v694
        %v806 = vpop.f32.mrf.mxu0
        %v807 = vadd.f32 %v636, %v806
        %808 = vmatmul.f32.gmra.mxu0 %v697
        %v809 = vpop.f32.mrf.mxu0
        %v810 = vadd.f32 %v636, %v809
        %811 = vmatmul.f32.gmra.mxu0 %v700
        %v812 = vpop.f32.mrf.mxu0
        %v813 = vadd.f32 %v636, %v812
        %814 = vmatmul.f32.gmra.mxu0 %v703
        %v815 = vpop.f32.mrf.mxu0
        %v816 = vadd.f32 %v636, %v815
        %817 = vmatmul.f32.gmra.mxu0 %v706
        %v818 = vpop.f32.mrf.mxu0
        %v819 = vadd.f32 %v636, %v818
        %820 = vmatmul.f32.gmra.mxu0 %v709
        %v821 = vpop.f32.mrf.mxu0
        %v822 = vadd.f32 %v636, %v821
        %823 = vmatmul.f32.gmra.mxu0 %v712
        %v824 = vpop.f32.mrf.mxu0
        %v825 = vadd.f32 %v636, %v824
        %826 = vmatmul.f32.gmra.mxu0 %v715
        %v827 = vpop.f32.mrf.mxu0
        %v828 = vadd.f32 %v636, %v827
        %829 = vmatmul.f32.gmra.mxu0 %v718
        %v830 = vpop.f32.mrf.mxu0
        %v831 = vadd.f32 %v636, %v830
        %832 = vmatmul.f32.gmra.mxu0 %v721
        %v833 = vpop.f32.mrf.mxu0
        %v834 = vadd.f32 %v636, %v833
        %835 = vmatmul.f32.gmra.mxu0 %v724
        %v836 = vpop.f32.mrf.mxu0
        %v837 = vadd.f32 %v636, %v836
        %838 = vmatmul.f32.gmra.mxu0 %v727
        %v839 = vpop.f32.mrf.mxu0
        %v840 = vadd.f32 %v636, %v839
        %841 = vmatmul.f32.gmra.mxu0 %v730
        %v842 = vpop.f32.mrf.mxu0
        %v843 = vadd.f32 %v636, %v842
        %844 = vmatmul.f32.gmra.mxu0 %v733
        %v845 = vpop.f32.mrf.mxu0
        %v846 = vadd.f32 %v636, %v845
        %847 = vdwg.mxu0
        %vm848 = vcmp.gt.f32.partialorder %v753, 0.0
        %vm849 = vcmp.gt.f32.partialorder %v756, 0.0
        %vm850 = vcmp.gt.f32.partialorder %v759, 0.0
        %vm851 = vcmp.gt.f32.partialorder %v762, 0.0
        %vm852 = vcmp.gt.f32.partialorder %v765, 0.0
        %vm853 = vcmp.gt.f32.partialorder %v768, 0.0
        %vm854 = vcmp.gt.f32.partialorder %v771, 0.0
        %vm855 = vcmp.gt.f32.partialorder %v774, 0.0
        %vm856 = vcmp.gt.f32.partialorder %v777, 0.0
        %vm857 = vcmp.gt.f32.partialorder %v780, 0.0
        %vm858 = vcmp.gt.f32.partialorder %v783, 0.0
        %vm859 = vcmp.gt.f32.partialorder %v786, 0.0
        %vm860 = vcmp.gt.f32.partialorder %v789, 0.0
        %vm861 = vcmp.gt.f32.partialorder %v792, 0.0
        %vm862 = vcmp.gt.f32.partialorder %v795, 0.0
        %vm863 = vcmp.gt.f32.partialorder %v798, 0.0
        %vm864 = vcmp.gt.f32.partialorder %v801, 0.0
        %vm865 = vcmp.gt.f32.partialorder %v804, 0.0
        %vm866 = vcmp.gt.f32.partialorder %v807, 0.0
        %vm867 = vcmp.gt.f32.partialorder %v810, 0.0
        %vm868 = vcmp.gt.f32.partialorder %v813, 0.0
        %vm869 = vcmp.gt.f32.partialorder %v816, 0.0
        %vm870 = vcmp.gt.f32.partialorder %v819, 0.0
        %vm871 = vcmp.gt.f32.partialorder %v822, 0.0
        %vm872 = vcmp.gt.f32.partialorder %v825, 0.0
        %vm873 = vcmp.gt.f32.partialorder %v828, 0.0
        %vm874 = vcmp.gt.f32.partialorder %v831, 0.0
        %vm875 = vcmp.gt.f32.partialorder %v834, 0.0
        %vm876 = vcmp.gt.f32.partialorder %v837, 0.0
        %vm877 = vcmp.gt.f32.partialorder %v840, 0.0
        %vm878 = vcmp.gt.f32.partialorder %v843, 0.0
        %vm879 = vcmp.gt.f32.partialorder %v846, 0.0
        %v880 = vmul.f32 %v753, 0.01
        %v881 = vmul.f32 %v756, 0.01
        %v882 = vmul.f32 %v759, 0.01
        %v883 = vmul.f32 %v762, 0.01
        %v884 = vmul.f32 %v765, 0.01
        %v885 = vmul.f32 %v768, 0.01
        %v886 = vmul.f32 %v771, 0.01
        %v887 = vmul.f32 %v774, 0.01
        %v888 = vmul.f32 %v777, 0.01
        %v889 = vmul.f32 %v780, 0.01
        %v890 = vmul.f32 %v783, 0.01
        %v891 = vmul.f32 %v786, 0.01
        %v892 = vmul.f32 %v789, 0.01
        %v893 = vmul.f32 %v792, 0.01
        %v894 = vmul.f32 %v795, 0.01
        %v895 = vmul.f32 %v798, 0.01
        %v896 = vmul.f32 %v801, 0.01
        %v897 = vmul.f32 %v804, 0.01
        %v898 = vmul.f32 %v807, 0.01
        %v899 = vmul.f32 %v810, 0.01
        %v900 = vmul.f32 %v813, 0.01
        %v901 = vmul.f32 %v816, 0.01
        %v902 = vmul.f32 %v819, 0.01
        %v903 = vmul.f32 %v822, 0.01
        %v904 = vmul.f32 %v825, 0.01
        %v905 = vmul.f32 %v828, 0.01
        %v906 = vmul.f32 %v831, 0.01
        %v907 = vmul.f32 %v834, 0.01
        %v908 = vmul.f32 %v837, 0.01
        %v909 = vmul.f32 %v840, 0.01
        %v910 = vmul.f32 %v843, 0.01
        %v911 = vmul.f32 %v846, 0.01
        %v912 = vsel %vm848, %v753, %v880
        %v913 = vsel %vm849, %v756, %v881
        %v914 = vsel %vm850, %v759, %v882
        %v915 = vsel %vm851, %v762, %v883
        %v916 = vsel %vm852, %v765, %v884
        %v917 = vsel %vm853, %v768, %v885
        %v918 = vsel %vm854, %v771, %v886
        %v919 = vsel %vm855, %v774, %v887
        %v920 = vsel %vm856, %v777, %v888
        %v921 = vsel %vm857, %v780, %v889
        %v922 = vsel %vm858, %v783, %v890
        %v923 = vsel %vm859, %v786, %v891
        %v924 = vsel %vm860, %v789, %v892
        %v925 = vsel %vm861, %v792, %v893
        %v926 = vsel %vm862, %v795, %v894
        %v927 = vsel %vm863, %v798, %v895
        %v928 = vsel %vm864, %v801, %v896
        %v929 = vsel %vm865, %v804, %v897
        %v930 = vsel %vm866, %v807, %v898
        %v931 = vsel %vm867, %v810, %v899
        %v932 = vsel %vm868, %v813, %v900
        %v933 = vsel %vm869, %v816, %v901
        %v934 = vsel %vm870, %v819, %v902
        %v935 = vsel %vm871, %v822, %v903
        %v936 = vsel %vm872, %v825, %v904
        %v937 = vsel %vm873, %v828, %v905
        %v938 = vsel %vm874, %v831, %v906
        %v939 = vsel %vm875, %v834, %v907
        %v940 = vsel %vm876, %v837, %v908
        %v941 = vsel %vm877, %v840, %v909
        %v942 = vsel %vm878, %v843, %v910
        %v943 = vsel %vm879, %v846, %v911
        %v944 = vld [vmem:[%s5] sm:$0xff]
        %v945 = vld [vmem:[%s6] sm:$0xff]
        %947 = vset.pattern.permute.xlu0 0
        %948 = vperm.xlu0 %947, %v945
        %v949 = vpop.permute.xlu0 %948
        %v952 = vsel %vm320, %v944, 0
        %v955 = vsel %vm320, %v912, 0
        %v958 = vsel %vm320, %v913, 0
        %v961 = vsel %vm320, %v914, 0
        %v964 = vsel %vm320, %v915, 0
        %v967 = vsel %vm320, %v916, 0
        %v970 = vsel %vm320, %v917, 0
        %v973 = vsel %vm320, %v918, 0
        %v976 = vsel %vm320, %v919, 0
        %v979 = vsel %vm320, %v920, 0
        %v982 = vsel %vm320, %v921, 0
        %v985 = vsel %vm320, %v922, 0
        %v988 = vsel %vm320, %v923, 0
        %v991 = vsel %vm320, %v924, 0
        %v994 = vsel %vm320, %v925, 0
        %v997 = vsel %vm320, %v926, 0
        %v1000 = vsel %vm320, %v927, 0
        %v1003 = vsel %vm320, %v928, 0
        %v1006 = vsel %vm320, %v929, 0
        %v1009 = vsel %vm320, %v930, 0
        %v1012 = vsel %vm320, %v931, 0
        %v1015 = vsel %vm320, %v932, 0
        %v1018 = vsel %vm320, %v933, 0
        %v1021 = vsel %vm320, %v934, 0
        %v1024 = vsel %vm320, %v935, 0
        %v1027 = vsel %vm320, %v936, 0
        %v1030 = vsel %vm320, %v937, 0
        %v1033 = vsel %vm320, %v938, 0
        %v1036 = vsel %vm320, %v939, 0
        %v1039 = vsel %vm320, %v940, 0
        %v1042 = vsel %vm320, %v941, 0
        %v1045 = vsel %vm320, %v942, 0
        %v1048 = vsel %vm320, %v943, 0
        %1050 = vmatpush.xpose.msra.mxu0 %v1000
        %1051 = vmatpush.xpose.msra.mxu0 %v997
        %1052 = vmatpush.xpose.msra.mxu0 %v994
        %1053 = vmatpush.xpose.msra.mxu0 %v991
        %1054 = vmatpush.xpose.msra.mxu0 %v988
        %1055 = vmatpush.xpose.msra.mxu0 %v985
        %1056 = vmatpush.xpose.msra.mxu0 %v982
        %1057 = vmatpush.xpose.msra.mxu0 %v979
        %1058 = vmatpush.xpose.msra.mxu0 %v976
        %1059 = vmatpush.xpose.msra.mxu0 %v973
        %1060 = vmatpush.xpose.msra.mxu0 %v970
        %1061 = vmatpush.xpose.msra.mxu0 %v967
        %1062 = vmatpush.xpose.msra.mxu0 %v964
        %1063 = vmatpush.xpose.msra.mxu0 %v961
        %1064 = vmatpush.xpose.msra.mxu0 %v958
        %1065 = vmatpush.xpose.msra.mxu0 %v955
        %1066 = vmatmul.f32.gmra.mxu0 %v952
        %v1067 = vpop.f32.mrf.mxu0
        %v1068 = vadd.f32 %v949, %v1067
        %1069 = vdwg.mxu0
        %1070 = vmatpush.xpose.msra.mxu0 %v1048
        %1071 = vmatpush.xpose.msra.mxu0 %v1045
        %1072 = vmatpush.xpose.msra.mxu0 %v1042
        %1073 = vmatpush.xpose.msra.mxu0 %v1039
        %1074 = vmatpush.xpose.msra.mxu0 %v1036
        %1075 = vmatpush.xpose.msra.mxu0 %v1033
        %1076 = vmatpush.xpose.msra.mxu0 %v1030
        %1077 = vmatpush.xpose.msra.mxu0 %v1027
        %1078 = vmatpush.xpose.msra.mxu0 %v1024
        %1079 = vmatpush.xpose.msra.mxu0 %v1021
        %1080 = vmatpush.xpose.msra.mxu0 %v1018
        %1081 = vmatpush.xpose.msra.mxu0 %v1015
        %1082 = vmatpush.xpose.msra.mxu0 %v1012
        %1083 = vmatpush.xpose.msra.mxu0 %v1009
        %1084 = vmatpush.xpose.msra.mxu0 %v1006
        %1085 = vmatpush.xpose.msra.mxu0 %v1003
        %1086 = vmatmul.f32.gmra.mxu0 %v952
        %v1087 = vpop.f32.mrf.mxu0
        %v1088 = vadd.f32 %v949, %v1087
        %1089 = vdwg.mxu0
        %1090 = vst [vmem:[%s272] sm:$0xff] %v1068
        %1091 = vst [vmem:[%s272 + $0x8] sm:$0xff] %v1088
        %s1092 = sand.u32 %s181, 1
        %s1093 = scalar_lea.sflag [#allocation3], %s1092
        %s1094 = sand.u32 %s181, 1
        %s1095 = smul.addr %s1094, 16
        %s1096 = scalar_lea.vmem [#allocation2], %s1095
        // Predicated region
        $region49: #{tpu_custom_call.1} parent=47 // pred_check
          %p1097 = pneg %p191
        $region50: #{tpu_custom_call.1} parent=47 // pred_check_branch
          %1099 = sbr.rel (%p1097) target = $region52
        $region51: #{tpu_custom_call.1} parent=47 // pred_region
          %s1100 = smul.u32 2, %s21
          %1102 = vsyncadd %s1093, 0
          %s1103 = smul.addr %s1100, 8
          %s1104 = scalar_lea.hbm %s7, %s1103
          %s1106 = sshll.u32 %s1096, 4
          %s1107 = int_to_ptr.vmem [resolvable:$true] %s1106
          %s1108 = sshll.u32 %s1104, 4
          %s1109 = int_to_ptr.hbm [resolvable:$true] %s1108
          %1111 = dma.vmem_to_hbm [thread:$0]  %s1107, 256, %s1109, %s1093
        $region52: #{tpu_custom_call.1} parent=47 // pred_fallthru
          _
      $region48: #{tpu_custom_call.1} parent=5 // pred_fallthru
        _
      %p1112 = scmp.le.s32.totalorder 2, %s16
      // Predicated region
      $region53: #{tpu_custom_call.1} parent=5 // pred_check
        %p1113 = pneg %p1112
      $region54: #{tpu_custom_call.1} parent=5 // pred_check_branch
        %1115 = sbr.rel (%p1113) target = $region56
      $region55: #{tpu_custom_call.1} parent=5 // pred_region
        %s1116 = ssub.s32 %s16, 2
        // Predicated region
        $region57: #{tpu_custom_call.1} parent=55 // pred_check
          %p1117 = pneg %p197
        $region58: #{tpu_custom_call.1} parent=55 // pred_check_branch
          %1119 = sbr.rel (%p1117) target = $region60
        $region59: #{tpu_custom_call.1} parent=55 // pred_region
          %s1120 = sand.u32 %s182, 1
          %s1121 = scalar_lea.sflag [#allocation3], %s1120
          %s1122 = sand.u32 %s182, 1
          %s1123 = smul.addr %s1122, 16
          %s1124 = scalar_lea.vmem [#allocation2], %s1123
          %1126 = dma.done %s1121, 256
        $region60: #{tpu_custom_call.1} parent=55 // pred_fallthru
          _
      $region56: #{tpu_custom_call.1} parent=5 // pred_fallthru
        _
    $region6: #{tpu_custom_call.1} parent=1 // loop_footer
      %s20 = sadd.s32 1, %s16
    $region7: #{tpu_custom_call.1} parent=1 // loop_footer_branch
      %15 = sbr.rel target = $region3
    $region8: #{tpu_custom_call.1} parent=1 // loop_exit
      _
    %1127 = vsyncpa [#allocation3], 1
    %s1128 = scalar_lea.sflag [#allocation3], 1
    %1129 = vsyncpa %s1128, 1

</llo_original>
